<compile_context>
chip_gen: v5e
topology: v5e:2x2
jax: 0.10.0
libtpu: 0.0.40
codegen_flags: <defaults>
</compile_context>

<pallas_src>
import jax
import jax.numpy as jnp
from jax.experimental import pallas as pl
from jax.experimental.pallas import tpu as pltpu

NEG_SLOPE = 0.01  # torch.nn.LeakyReLU default


def _leaky_relu(h):
    return jnp.where(h > 0, h, NEG_SLOPE * h)


def mlp_kernel(xT_ref,
               w12_ref, b12_ref,
               w3_ref, b3_ref,
               w4_ref, b4_ref,
               oT_ref):
    # Transposed layout: activations are (features, tb); batch on the lane axis.
    xT = xT_ref[...]                                                  # (6, tb) bf16

    # Fused Linear(6,1000)+Linear(1000,100):  h^T = W12^T @ x^T + b12^T
    h = jnp.dot(w12_ref[...], xT,
                preferred_element_type=jnp.float32) + b12_ref[...]    # (100, tb) f32
    h = _leaky_relu(h)

    # Linear(100, 50)
    h = jnp.dot(w3_ref[...], h.astype(w3_ref.dtype),
                preferred_element_type=jnp.float32) + b3_ref[...]     # (50, tb) f32
    h = _leaky_relu(h)

    # Linear(50, 6)
    h = jnp.dot(w4_ref[...], h.astype(w4_ref.dtype),
                preferred_element_type=jnp.float32) + b4_ref[...]     # (6, tb) f32

    oT_ref[...] = h.astype(oT_ref.dtype)                              # lane-dense store


def _fold_params(params, compute_dtype):
    """Fold layers 1&2 and transpose everything to the (out, in) kernel layout."""
    # y = (x @ w1 + b1) @ w2 + b2 = x @ (w1 @ w2) + (b1 @ w2 + b2)   (no activation)
    w12 = params["w1"] @ params["w2"]                  # (6, 100)
    b12 = params["b1"] @ params["w2"] + params["b2"]   # (1, 100)
    return (
        w12.T.astype(compute_dtype),                   # (100, 6)
        b12.T.astype(jnp.float32),                     # (100, 1)
        params["w3"].T.astype(compute_dtype),          # (50, 100)
        params["b3"].T.astype(jnp.float32),            # (50, 1)
        params["w4"].T.astype(compute_dtype),          # (6, 50)
        params["b4"].T.astype(jnp.float32),            # (6, 1)
    )


def mlp_forward(x, params, *, tb=None, compute_dtype=jnp.bfloat16):
    """x: (B, 6) float32.  params: dict of (in,out) weights and (1,out) biases."""
    B, D_in = x.shape
    assert D_in == 6

    if tb is None:
        if B % 256 == 0 and B >= 512:
            tb = 256          # >=2 grid steps -> megacore sharding on v7x
        elif B % 128 == 0:
            tb = 128
        else:
            tb = B            # tiny/ragged batch: one (lane-padded) step
    assert B % tb == 0
    grid = (B // tb,)

    w12t, b12t, w3t, b3t, w4t, b4t = _fold_params(params, compute_dtype)
    xT = x.T.astype(compute_dtype)                     # (6, B): batch on lanes

    full = lambda arr: pl.BlockSpec(arr.shape, lambda i: (0, 0))

    weight_bytes = sum(int(a.size) * a.dtype.itemsize
                       for a in (w12t, b12t, w3t, b3t, w4t, b4t))
    cost = pl.CostEstimate(
        flops=2 * B * (6 * 100 + 100 * 50 + 50 * 6),
        transcendentals=0,
        bytes_accessed=int(xT.size) * xT.dtype.itemsize + B * 6 * 4 + weight_bytes,
    )

    outT = pl.pallas_call(
        mlp_kernel,
        out_shape=jax.ShapeDtypeStruct((6, B), x.dtype),
        grid=grid,
        in_specs=[
            pl.BlockSpec((6, tb), lambda i: (0, i)),   # activation tile over batch
            full(w12t), full(b12t),
            full(w3t), full(b3t),
            full(w4t), full(b4t),
        ],
        out_specs=pl.BlockSpec((6, tb), lambda i: (0, i)),
        compiler_params=pltpu.CompilerParams(
            dimension_semantics=("parallel",)),
        cost_estimate=cost,
    )(xT, w12t, b12t, w3t, b3t, w4t, b4t)

    return outT.T                                      # back to (B, 6)


def init_params(key):
    """Deterministic synthetic init mimicking nn.Linear's U(-1/sqrt(fan_in), ...)."""
    dims = [(6, 1000), (1000, 100), (100, 50), (50, 6)]
    params = {}
    for idx, (fan_in, fan_out) in enumerate(dims, start=1):
        key, kw, kb = jax.random.split(key, 3)
        bound = 1.0 / jnp.sqrt(jnp.float32(fan_in))
        params[f"w{idx}"] = jax.random.uniform(
            kw, (fan_in, fan_out), jnp.float32, -bound, bound)
        params[f"b{idx}"] = jax.random.uniform(
            kb, (1, fan_out), jnp.float32, -bound, bound)
    return params


def mlp_reference(x, params):
    """Pure-JAX f32 reference, layer order exactly as the PyTorch Sequential."""
    h = x @ params["w1"] + params["b1"]
    h = h @ params["w2"] + params["b2"]
    h = jnp.where(h > 0, h, NEG_SLOPE * h)
    h = h @ params["w3"] + params["b3"]
    h = jnp.where(h > 0, h, NEG_SLOPE * h)
    h = h @ params["w4"] + params["b4"]
    return h


if __name__ == "__main__":
    key = jax.random.PRNGKey(0)
    key, kx = jax.random.split(key)

    B = 512                           # 2 grid steps of tb=256 (v7x: both TCs)
    x = jax.random.normal(kx, (B, 6), jnp.float32)
    params = init_params(key)

    out = mlp_forward(x, params)
    out = jax.block_until_ready(out)

    ref = mlp_reference(x, params)
    assert out.shape == (B, 6)
    # bf16 MXU inputs -> relaxed tolerance vs the f32 reference.
    assert jnp.allclose(out, ref, atol=2e-2, rtol=2e-2), (
        f"max abs err {jnp.max(jnp.abs(out - ref))}")

    print("KERNEL_OK")
</pallas_src>

<mosaic_0001>
module attributes {stable_mosaic.version = 11 : i64} {
  func.func @mlp_kernel(%arg0: i32, %arg1: memref<6x256xbf16, #tpu.memory_space<vmem>>, %arg2: memref<100x6xbf16, #tpu.memory_space<vmem>>, %arg3: memref<100x1xf32, #tpu.memory_space<vmem>>, %arg4: memref<50x100xbf16, #tpu.memory_space<vmem>>, %arg5: memref<50x1xf32, #tpu.memory_space<vmem>>, %arg6: memref<6x50xbf16, #tpu.memory_space<vmem>>, %arg7: memref<6x1xf32, #tpu.memory_space<vmem>>, %arg8: memref<6x256xf32, #tpu.memory_space<vmem>>) attributes {dimension_semantics = [#tpu.dimension_semantics<parallel>], iteration_bounds = array<i64: 2>, scalar_prefetch = 0 : i64, scratch_operands = 0 : i64, tpu.core_type = #tpu.core_type<tc>, window_params = [{transform_indices = @transform_0, window_bounds = array<i64: 6, 256>}, {pipeline_mode = #tpu.pipeline_mode<synchronous>, transform_indices = @transform_1, window_bounds = array<i64: 100, 6>}, {pipeline_mode = #tpu.pipeline_mode<synchronous>, transform_indices = @transform_2, window_bounds = array<i64: 100, 1>}, {pipeline_mode = #tpu.pipeline_mode<synchronous>, transform_indices = @transform_3, window_bounds = array<i64: 50, 100>}, {pipeline_mode = #tpu.pipeline_mode<synchronous>, transform_indices = @transform_4, window_bounds = array<i64: 50, 1>}, {pipeline_mode = #tpu.pipeline_mode<synchronous>, transform_indices = @transform_5, window_bounds = array<i64: 6, 50>}, {pipeline_mode = #tpu.pipeline_mode<synchronous>, transform_indices = @transform_6, window_bounds = array<i64: 6, 1>}, {transform_indices = @transform_7, window_bounds = array<i64: 6, 256>}]} {
    %c0 = arith.constant 0 : index
    %c0_0 = arith.constant 0 : index
    %0 = vector.load %arg1[%c0, %c0_0] : memref<6x256xbf16, #tpu.memory_space<vmem>>, vector<6x256xbf16>
    %c0_1 = arith.constant 0 : index
    %c0_2 = arith.constant 0 : index
    %1 = vector.load %arg2[%c0_1, %c0_2] : memref<100x6xbf16, #tpu.memory_space<vmem>>, vector<100x6xbf16>
    %cst = arith.constant dense<0.000000e+00> : vector<100x256xf32>
    %2 = tpu.matmul %1, %0, %cst {dimension_numbers = #tpu.dot_dimension_numbers<[1], [0], [0], [1], [0, 0, 1, 1], [], []>} : vector<100x6xbf16>, vector<6x256xbf16>, vector<100x256xf32> -> vector<100x256xf32>
    %c0_3 = arith.constant 0 : index
    %c0_4 = arith.constant 0 : index
    %3 = vector.load %arg3[%c0_3, %c0_4] : memref<100x1xf32, #tpu.memory_space<vmem>>, vector<100x1xf32>
    %4 = vector.broadcast %3 : vector<100x1xf32> to vector<100x256xf32>
    %5 = arith.addf %2, %4 : vector<100x256xf32>
    %cst_5 = arith.constant 0.000000e+00 : f32
    %6 = vector.broadcast %cst_5 : f32 to vector<100x256xf32>
    %7 = arith.cmpf ogt, %5, %6 : vector<100x256xf32>
    %cst_6 = arith.constant 0.00999999977 : f32
    %8 = vector.broadcast %cst_6 : f32 to vector<100x256xf32>
    %9 = arith.mulf %8, %5 : vector<100x256xf32>
    %10 = arith.select %7, %5, %9 : vector<100x256xi1>, vector<100x256xf32>
    %c0_7 = arith.constant 0 : index
    %c0_8 = arith.constant 0 : index
    %11 = vector.load %arg4[%c0_7, %c0_8] : memref<50x100xbf16, #tpu.memory_space<vmem>>, vector<50x100xbf16>
    %12 = arith.truncf %10 : vector<100x256xf32> to vector<100x256xbf16>
    %cst_9 = arith.constant dense<0.000000e+00> : vector<50x256xf32>
    %13 = tpu.matmul %11, %12, %cst_9 {dimension_numbers = #tpu.dot_dimension_numbers<[1], [0], [0], [1], [0, 0, 1, 1], [], []>} : vector<50x100xbf16>, vector<100x256xbf16>, vector<50x256xf32> -> vector<50x256xf32>
    %c0_10 = arith.constant 0 : index
    %c0_11 = arith.constant 0 : index
    %14 = vector.load %arg5[%c0_10, %c0_11] : memref<50x1xf32, #tpu.memory_space<vmem>>, vector<50x1xf32>
    %15 = vector.broadcast %14 : vector<50x1xf32> to vector<50x256xf32>
    %16 = arith.addf %13, %15 : vector<50x256xf32>
    %cst_12 = arith.constant 0.000000e+00 : f32
    %17 = vector.broadcast %cst_12 : f32 to vector<50x256xf32>
    %18 = arith.cmpf ogt, %16, %17 : vector<50x256xf32>
    %cst_13 = arith.constant 0.00999999977 : f32
    %19 = vector.broadcast %cst_13 : f32 to vector<50x256xf32>
    %20 = arith.mulf %19, %16 : vector<50x256xf32>
    %21 = arith.select %18, %16, %20 : vector<50x256xi1>, vector<50x256xf32>
    %c0_14 = arith.constant 0 : index
    %c0_15 = arith.constant 0 : index
    %22 = vector.load %arg6[%c0_14, %c0_15] : memref<6x50xbf16, #tpu.memory_space<vmem>>, vector<6x50xbf16>
    %23 = arith.truncf %21 : vector<50x256xf32> to vector<50x256xbf16>
    %cst_16 = arith.constant dense<0.000000e+00> : vector<6x256xf32>
    %24 = tpu.matmul %22, %23, %cst_16 {dimension_numbers = #tpu.dot_dimension_numbers<[1], [0], [0], [1], [0, 0, 1, 1], [], []>} : vector<6x50xbf16>, vector<50x256xbf16>, vector<6x256xf32> -> vector<6x256xf32>
    %c0_17 = arith.constant 0 : index
    %c0_18 = arith.constant 0 : index
    %25 = vector.load %arg7[%c0_17, %c0_18] : memref<6x1xf32, #tpu.memory_space<vmem>>, vector<6x1xf32>
    %26 = vector.broadcast %25 : vector<6x1xf32> to vector<6x256xf32>
    %27 = arith.addf %24, %26 : vector<6x256xf32>
    %c0_19 = arith.constant 0 : index
    %c0_20 = arith.constant 0 : index
    %28 = vector.load %arg8[%c0_19, %c0_20] : memref<6x256xf32, #tpu.memory_space<vmem>>, vector<6x256xf32>
    tpu.vector_store %arg8[%c0_19, %c0_20], %27 {strides = array<i32>} : memref<6x256xf32, #tpu.memory_space<vmem>>, vector<6x256xf32>,
    return
  }
  func.func @transform_0(%arg0: i32) -> (i32, i32) {
    %c0_i32 = arith.constant 0 : i32
    %c0_i32_0 = arith.constant 0 : i32
    return %c0_i32, %arg0 : i32, i32
  }
  func.func @transform_1(%arg0: i32) -> (i32, i32) {
    %c0_i32 = arith.constant 0 : i32
    %c0_i32_0 = arith.constant 0 : i32
    %c0_i32_1 = arith.constant 0 : i32
    return %c0_i32, %c0_i32_0 : i32, i32
  }
  func.func @transform_2(%arg0: i32) -> (i32, i32) {
    %c0_i32 = arith.constant 0 : i32
    %c0_i32_0 = arith.constant 0 : i32
    %c0_i32_1 = arith.constant 0 : i32
    return %c0_i32, %c0_i32_0 : i32, i32
  }
  func.func @transform_3(%arg0: i32) -> (i32, i32) {
    %c0_i32 = arith.constant 0 : i32
    %c0_i32_0 = arith.constant 0 : i32
    %c0_i32_1 = arith.constant 0 : i32
    return %c0_i32, %c0_i32_0 : i32, i32
  }
  func.func @transform_4(%arg0: i32) -> (i32, i32) {
    %c0_i32 = arith.constant 0 : i32
    %c0_i32_0 = arith.constant 0 : i32
    %c0_i32_1 = arith.constant 0 : i32
    return %c0_i32, %c0_i32_0 : i32, i32
  }
  func.func @transform_5(%arg0: i32) -> (i32, i32) {
    %c0_i32 = arith.constant 0 : i32
    %c0_i32_0 = arith.constant 0 : i32
    %c0_i32_1 = arith.constant 0 : i32
    return %c0_i32, %c0_i32_0 : i32, i32
  }
  func.func @transform_6(%arg0: i32) -> (i32, i32) {
    %c0_i32 = arith.constant 0 : i32
    %c0_i32_0 = arith.constant 0 : i32
    %c0_i32_1 = arith.constant 0 : i32
    return %c0_i32, %c0_i32_0 : i32, i32
  }
  func.func @transform_7(%arg0: i32) -> (i32, i32) {
    %c0_i32 = arith.constant 0 : i32
    %c0_i32_0 = arith.constant 0 : i32
    return %c0_i32, %arg0 : i32, i32
  }
}

</mosaic_0001>

<llo_original>
// kernel: tpu_custom_call.1
$region0: #{tpu_custom_call.1}
  #allocation0 [shape = 'u32[]', space=smem, size = 0x4, offset = 0x4, fixed_abs, tag = 'smem constant byte address 0x4 - core index']
  #allocation1 [shape = 'u32[72,128]{1,0:T(1,128)}', space=vmem, size = 0x9000, scoped, tag = 'internal scratch']
  %s0 = inlined_call_operand.vmem [shape: bf16[6,512], index: 0, kind: input, shape index: {}]
  %s1 = inlined_call_operand.vmem [shape: bf16[100,6], index: 1, kind: input, shape index: {}]
  %s2 = inlined_call_operand.vmem [shape: f32[100,1], index: 2, kind: input, shape index: {}]
  %s3 = inlined_call_operand.vmem [shape: bf16[50,100], index: 3, kind: input, shape index: {}]
  %s4 = inlined_call_operand.vmem [shape: f32[50,1], index: 4, kind: input, shape index: {}]
  %s5 = inlined_call_operand.vmem [shape: bf16[6,50], index: 5, kind: input, shape index: {}]
  %s6 = inlined_call_operand.vmem [shape: f32[6,1], index: 6, kind: input, shape index: {}]
  %s7 = inlined_call_operand.hbm [shape: f32[6,512], index: 7, kind: output, shape index: {}]
  %s8 = sld [smem:[#allocation0]]
  $region61: #{tpu_custom_call.1} parent=0
    _
  %s10 = ssub.s32 1, %s8
  %s11 = scalar_select 0, %s10, %s8
  $region1: #{tpu_custom_call.1} parent=0
    #allocation2 [shape = 'u8[16384]{0}', space=vmem, size = 0x4000, scoped, tag = 'output window, operand 0']
    #allocation3 [shape = 's32[2]{0}', space=sflag, size = 0x8, scoped, tag = 'scoped memory for tpu_custom_call.1']
    %12 = vsyncpa [#allocation3], 0
    %s13 = scalar_lea.sflag [#allocation3], 1
    %14 = vsyncpa %s13, 0
    loop: start=0, step=1, limit=4
    $region2: #{tpu_custom_call.1} parent=1 // loop_pre_header
      _
    $region3: #{tpu_custom_call.1} parent=1 // loop_header
      %s16 = sphi 0, %s20
      %p17 = scmp.ge.s32.totalorder %s16, 4
      %s26 = sphi 0, %s28
      %s29 = sphi 0, %s26
      %s30 = sphi 0, %s29
      %s46 = sphi 0, %s30
      %s50 = sphi 0, %s50
      %s52 = sphi 0, %s50
      %s53 = sphi 0, %s52
      %s67 = sphi 0, %s53
      %s71 = sphi 0, %s71
      %s73 = sphi 0, %s71
      %s74 = sphi 0, %s73
      %s88 = sphi 0, %s74
      %s92 = sphi 0, %s92
      %s94 = sphi 0, %s92
      %s95 = sphi 0, %s94
      %s109 = sphi 0, %s95
      %s113 = sphi 0, %s113
      %s115 = sphi 0, %s113
      %s116 = sphi 0, %s115
      %s130 = sphi 0, %s116
      %s134 = sphi 0, %s134
      %s136 = sphi 0, %s134
      %s137 = sphi 0, %s136
      %s151 = sphi 0, %s137
      %s155 = sphi 0, %s155
      %s157 = sphi 0, %s155
      %s158 = sphi 0, %s157
      %s172 = sphi 0, %s158
      %s178 = sphi 0, %s180
      %s181 = sphi 0, %s178
      %s182 = sphi 0, %s181
      %s198 = sphi 0, %s182
    $region4: #{tpu_custom_call.1} parent=1 // loop_header_branch
      %19 = sbr.rel (%p17) target = $region8
    $region5: #{tpu_custom_call.1} parent=1 // loop_body
      %s21 = ssub.s32 %s16, 1
      %s22 = ssub.s32 %s16, 2
      %s23 = sadd.s32 %s16, 1
      %s24 = ssub.s32 %s16, %s23
      %p25 = scmp.eq.s32.totalorder %s24, 0
      %s27 = sadd.s32 %s26, 1
      %s28 = scalar_select %p25, %s26, %s27
      %p31 = pneg %p25
      %p32 = scmp.eq.s32.totalorder %s16, 1
      %p33 = por %p31, %p32
      %p34 = scmp.ne.s32.totalorder %s26, %s29
      %p35 = scmp.eq.s32.totalorder %s16, 0
      %p36 = por %p34, %p35
      %p37 = scmp.ne.s32.totalorder %s26, %s29
      %p38 = scmp.eq.s32.totalorder %s21, 1
      %p39 = por %p37, %p38
      %p40 = scmp.ne.s32.totalorder %s29, %s30
      %p41 = scmp.eq.s32.totalorder %s21, 0
      %p42 = por %p40, %p41
      %p43 = scmp.ne.s32.totalorder %s29, %s30
      %p44 = scmp.eq.s32.totalorder %s22, 1
      %p45 = por %p43, %p44
      %p47 = scmp.ne.s32.totalorder %s30, %s46
      %p48 = scmp.eq.s32.totalorder %s22, 0
      %p49 = por %p47, %p48
      %s51 = sadd.s32 %s50, 1
      %p54 = scmp.eq.s32.totalorder %s16, 1
      %p55 = scmp.ne.s32.totalorder %s50, %s52
      %p56 = scmp.eq.s32.totalorder %s16, 0
      %p57 = por %p55, %p56
      %p58 = scmp.ne.s32.totalorder %s50, %s52
      %p59 = scmp.eq.s32.totalorder %s21, 1
      %p60 = por %p58, %p59
      %p61 = scmp.ne.s32.totalorder %s52, %s53
      %p62 = scmp.eq.s32.totalorder %s21, 0
      %p63 = por %p61, %p62
      %p64 = scmp.ne.s32.totalorder %s52, %s53
      %p65 = scmp.eq.s32.totalorder %s22, 1
      %p66 = por %p64, %p65
      %p68 = scmp.ne.s32.totalorder %s53, %s67
      %p69 = scmp.eq.s32.totalorder %s22, 0
      %p70 = por %p68, %p69
      %s72 = sadd.s32 %s71, 1
      %p75 = scmp.eq.s32.totalorder %s16, 1
      %p76 = scmp.ne.s32.totalorder %s71, %s73
      %p77 = scmp.eq.s32.totalorder %s16, 0
      %p78 = por %p76, %p77
      %p79 = scmp.ne.s32.totalorder %s71, %s73
      %p80 = scmp.eq.s32.totalorder %s21, 1
      %p81 = por %p79, %p80
      %p82 = scmp.ne.s32.totalorder %s73, %s74
      %p83 = scmp.eq.s32.totalorder %s21, 0
      %p84 = por %p82, %p83
      %p85 = scmp.ne.s32.totalorder %s73, %s74
      %p86 = scmp.eq.s32.totalorder %s22, 1
      %p87 = por %p85, %p86
      %p89 = scmp.ne.s32.totalorder %s74, %s88
      %p90 = scmp.eq.s32.totalorder %s22, 0
      %p91 = por %p89, %p90
      %s93 = sadd.s32 %s92, 1
      %p96 = scmp.eq.s32.totalorder %s16, 1
      %p97 = scmp.ne.s32.totalorder %s92, %s94
      %p98 = scmp.eq.s32.totalorder %s16, 0
      %p99 = por %p97, %p98
      %p100 = scmp.ne.s32.totalorder %s92, %s94
      %p101 = scmp.eq.s32.totalorder %s21, 1
      %p102 = por %p100, %p101
      %p103 = scmp.ne.s32.totalorder %s94, %s95
      %p104 = scmp.eq.s32.totalorder %s21, 0
      %p105 = por %p103, %p104
      %p106 = scmp.ne.s32.totalorder %s94, %s95
      %p107 = scmp.eq.s32.totalorder %s22, 1
      %p108 = por %p106, %p107
      %p110 = scmp.ne.s32.totalorder %s95, %s109
      %p111 = scmp.eq.s32.totalorder %s22, 0
      %p112 = por %p110, %p111
      %s114 = sadd.s32 %s113, 1
      %p117 = scmp.eq.s32.totalorder %s16, 1
      %p118 = scmp.ne.s32.totalorder %s113, %s115
      %p119 = scmp.eq.s32.totalorder %s16, 0
      %p120 = por %p118, %p119
      %p121 = scmp.ne.s32.totalorder %s113, %s115
      %p122 = scmp.eq.s32.totalorder %s21, 1
      %p123 = por %p121, %p122
      %p124 = scmp.ne.s32.totalorder %s115, %s116
      %p125 = scmp.eq.s32.totalorder %s21, 0
      %p126 = por %p124, %p125
      %p127 = scmp.ne.s32.totalorder %s115, %s116
      %p128 = scmp.eq.s32.totalorder %s22, 1
      %p129 = por %p127, %p128
      %p131 = scmp.ne.s32.totalorder %s116, %s130
      %p132 = scmp.eq.s32.totalorder %s22, 0
      %p133 = por %p131, %p132
      %s135 = sadd.s32 %s134, 1
      %p138 = scmp.eq.s32.totalorder %s16, 1
      %p139 = scmp.ne.s32.totalorder %s134, %s136
      %p140 = scmp.eq.s32.totalorder %s16, 0
      %p141 = por %p139, %p140
      %p142 = scmp.ne.s32.totalorder %s134, %s136
      %p143 = scmp.eq.s32.totalorder %s21, 1
      %p144 = por %p142, %p143
      %p145 = scmp.ne.s32.totalorder %s136, %s137
      %p146 = scmp.eq.s32.totalorder %s21, 0
      %p147 = por %p145, %p146
      %p148 = scmp.ne.s32.totalorder %s136, %s137
      %p149 = scmp.eq.s32.totalorder %s22, 1
      %p150 = por %p148, %p149
      %p152 = scmp.ne.s32.totalorder %s137, %s151
      %p153 = scmp.eq.s32.totalorder %s22, 0
      %p154 = por %p152, %p153
      %s156 = sadd.s32 %s155, 1
      %p159 = scmp.eq.s32.totalorder %s16, 1
      %p160 = scmp.ne.s32.totalorder %s155, %s157
      %p161 = scmp.eq.s32.totalorder %s16, 0
      %p162 = por %p160, %p161
      %p163 = scmp.ne.s32.totalorder %s155, %s157
      %p164 = scmp.eq.s32.totalorder %s21, 1
      %p165 = por %p163, %p164
      %p166 = scmp.ne.s32.totalorder %s157, %s158
      %p167 = scmp.eq.s32.totalorder %s21, 0
      %p168 = por %p166, %p167
      %p169 = scmp.ne.s32.totalorder %s157, %s158
      %p170 = scmp.eq.s32.totalorder %s22, 1
      %p171 = por %p169, %p170
      %p173 = scmp.ne.s32.totalorder %s158, %s172
      %p174 = scmp.eq.s32.totalorder %s22, 0
      %p175 = por %p173, %p174
      %s176 = ssub.s32 %s16, %s23
      %p177 = scmp.eq.s32.totalorder %s176, 0
      %s179 = sadd.s32 %s178, 1
      %s180 = scalar_select %p177, %s178, %s179
      %p183 = pneg %p177
      %p184 = scmp.eq.s32.totalorder %s16, 1
      %p185 = por %p183, %p184
      %p186 = scmp.ne.s32.totalorder %s178, %s181
      %p187 = scmp.eq.s32.totalorder %s16, 0
      %p188 = por %p186, %p187
      %p189 = scmp.ne.s32.totalorder %s178, %s181
      %p190 = scmp.eq.s32.totalorder %s21, 1
      %p191 = por %p189, %p190
      %p192 = scmp.ne.s32.totalorder %s181, %s182
      %p193 = scmp.eq.s32.totalorder %s21, 0
      %p194 = por %p192, %p193
      %p195 = scmp.ne.s32.totalorder %s181, %s182
      %p196 = scmp.eq.s32.totalorder %s22, 1
      %p197 = por %p195, %p196
      %p199 = scmp.ne.s32.totalorder %s182, %s198
      %p200 = scmp.eq.s32.totalorder %s22, 0
      %p201 = por %p199, %p200
      %p202 = scmp.le.s32.totalorder 1, %s16
      %p203 = scmp.lt.s32.totalorder %s16, 3
      %p204 = pnand %p202, %p203
      %p205 = pneg %p204
      // Predicated region
      $region9: #{tpu_custom_call.1} parent=5 // pred_check
        _
      $region10: #{tpu_custom_call.1} parent=5 // pred_check_branch
        %207 = sbr.rel (%p204) target = $region12
      $region11: #{tpu_custom_call.1} parent=5 // pred_region
        %s208 = ssub.s32 %s16, 1
        // Predicated region
        $region13: #{tpu_custom_call.1} parent=11 // pred_check
          %p209 = pneg %p63
        $region14: #{tpu_custom_call.1} parent=11 // pred_check_branch
          %211 = sbr.rel (%p209) target = $region16
        $region15: #{tpu_custom_call.1} parent=11 // pred_region
          _
        $region16: #{tpu_custom_call.1} parent=11 // pred_fallthru
          _
        // Predicated region
        $region17: #{tpu_custom_call.1} parent=11 // pred_check
          %p212 = pneg %p84
        $region18: #{tpu_custom_call.1} parent=11 // pred_check_branch
          %214 = sbr.rel (%p212) target = $region20
        $region19: #{tpu_custom_call.1} parent=11 // pred_region
          _
        $region20: #{tpu_custom_call.1} parent=11 // pred_fallthru
          _
        // Predicated region
        $region21: #{tpu_custom_call.1} parent=11 // pred_check
          %p215 = pneg %p105
        $region22: #{tpu_custom_call.1} parent=11 // pred_check_branch
          %217 = sbr.rel (%p215) target = $region24
        $region23: #{tpu_custom_call.1} parent=11 // pred_region
          _
        $region24: #{tpu_custom_call.1} parent=11 // pred_fallthru
          _
        // Predicated region
        $region25: #{tpu_custom_call.1} parent=11 // pred_check
          %p218 = pneg %p126
        $region26: #{tpu_custom_call.1} parent=11 // pred_check_branch
          %220 = sbr.rel (%p218) target = $region28
        $region27: #{tpu_custom_call.1} parent=11 // pred_region
          _
        $region28: #{tpu_custom_call.1} parent=11 // pred_fallthru
          _
        // Predicated region
        $region29: #{tpu_custom_call.1} parent=11 // pred_check
          %p221 = pneg %p147
        $region30: #{tpu_custom_call.1} parent=11 // pred_check_branch
          %223 = sbr.rel (%p221) target = $region32
        $region31: #{tpu_custom_call.1} parent=11 // pred_region
          _
        $region32: #{tpu_custom_call.1} parent=11 // pred_fallthru
          _
        // Predicated region
        $region33: #{tpu_custom_call.1} parent=11 // pred_check
          %p224 = pneg %p168
        $region34: #{tpu_custom_call.1} parent=11 // pred_check_branch
          %226 = sbr.rel (%p224) target = $region36
        $region35: #{tpu_custom_call.1} parent=11 // pred_region
          _
        $region36: #{tpu_custom_call.1} parent=11 // pred_fallthru
          _
      $region12: #{tpu_custom_call.1} parent=5 // pred_fallthru
        _
      %p227 = scmp.lt.s32.totalorder %s16, 2
      // Predicated region
      $region37: #{tpu_custom_call.1} parent=5 // pred_check
        %p228 = pneg %p227
      $region38: #{tpu_custom_call.1} parent=5 // pred_check_branch
        %230 = sbr.rel (%p228) target = $region40
      $region39: #{tpu_custom_call.1} parent=5 // pred_region
        // Predicated region
        $region41: #{tpu_custom_call.1} parent=39 // pred_check
          %p231 = pneg %p36
        $region42: #{tpu_custom_call.1} parent=39 // pred_check_branch
          %233 = sbr.rel (%p231) target = $region44
        $region43: #{tpu_custom_call.1} parent=39 // pred_region
          %s234 = smul.u32 2, %s16
          %p235 = scmp.lt.s32.totalorder %s234, 3
          %s236 = scalar_select %p235, %s234, 3
          %s237 = smul.addr %s236, 4
          %s238 = scalar_lea.vmem %s0, %s237
          %s239 = smul.u32 2, %s16
        $region44: #{tpu_custom_call.1} parent=39 // pred_fallthru
          _
      $region40: #{tpu_custom_call.1} parent=5 // pred_fallthru
        _
      %p240 = scmp.le.s32.totalorder 1, %s16
      %p241 = scmp.lt.s32.totalorder %s16, 3
      %p242 = pnand %p240, %p241
      %p243 = pneg %p242
      // Predicated region
      $region45: #{tpu_custom_call.1} parent=5 // pred_check
        _
      $region46: #{tpu_custom_call.1} parent=5 // pred_check_branch
        %245 = sbr.rel (%p242) target = $region48
      $region47: #{tpu_custom_call.1} parent=5 // pred_region
        %s246 = ssub.s32 %s16, 1
        %s247 = smul.u32 2, %s21
        %p248 = scmp.lt.s32.totalorder %s247, 3
        %s249 = scalar_select %p248, %s247, 3
        %s250 = smul.addr %s249, 4
        %s251 = scalar_lea.vmem %s0, %s250
        %p252 = pneg %p42
        %p253 = pneg %p39
        %p254 = pneg %p63
        %p255 = pneg %p60
        %p256 = pneg %p84
        %p257 = pneg %p81
        %p258 = pneg %p105
        %p259 = pneg %p102
        %p260 = pneg %p126
        %p261 = pneg %p123
        %p262 = pneg %p147
        %p263 = pneg %p144
        %p264 = pneg %p168
        %p265 = pneg %p165
        %p266 = pneg %p194
        %p267 = pneg %p191
        %s268 = sand.u32 %s181, 1
        %s269 = scalar_lea.sflag [#allocation3], %s268
        %s270 = sand.u32 %s181, 1
        %s271 = smul.addr %s270, 16
        %s272 = scalar_lea.vmem [#allocation2], %s271
        %s273 = smul.u32 2, %s21
        %p274 = scmp.lt.s32.totalorder %s273, 3
        %s275 = scalar_select %p274, %s273, 3
        %s276 = smul.addr %s275, 4
        %s277 = scalar_lea.vmem %s0, %s276
        %s278 = smul.u32 2, %s21
        %s279 = smul.u32 2, %s21
        %v281 = vld [vmem:[%s277] sm:$0x77]
        %v282 = vld [vmem:[%s1] sm:$0xf]
        %v283 = vld [vmem:[%s1 + $0x4] sm:$0xf]
        %v284 = vld [vmem:[%s1 + $0x8] sm:$0xf]
        %v285 = vld [vmem:[%s1 + $0xc] sm:$0xf]
        %v286 = vld [vmem:[%s1 + $0x10] sm:$0xf]
        %v287 = vld [vmem:[%s1 + $0x14] sm:$0xf]
        %v288 = vld [vmem:[%s1 + $0x18] sm:$0xf]
        %v289 = vld [vmem:[%s1 + $0x1c] sm:$0xf]
        %v290 = vld [vmem:[%s1 + $0x20] sm:$0xf]
        %v291 = vld [vmem:[%s1 + $0x24] sm:$0xf]
        %v292 = vld [vmem:[%s1 + $0x28] sm:$0xf]
        %v293 = vld [vmem:[%s1 + $0x2c] sm:$0xf]
        %v294 = vld [vmem:[%s1 + $0x30] sm:$0x3]
        %v295 = vld [vmem:[%s2] sm:$0xff]
        %v296 = vld [vmem:[%s2 + $0x8] sm:$0xff]
        %v297 = vld [vmem:[%s2 + $0x10] sm:$0xff]
        %v298 = vld [vmem:[%s2 + $0x18] sm:$0xff]
        %v299 = vld [vmem:[%s2 + $0x20] sm:$0xff]
        %v300 = vld [vmem:[%s2 + $0x28] sm:$0xff]
        %v301 = vld [vmem:[%s2 + $0x30] sm:$0xff]
        %v302 = vld [vmem:[%s2 + $0x38] sm:$0xff]
        %v303 = vld [vmem:[%s2 + $0x40] sm:$0xff]
        %v304 = vld [vmem:[%s2 + $0x48] sm:$0xff]
        %v305 = vld [vmem:[%s2 + $0x50] sm:$0xff]
        %v306 = vld [vmem:[%s2 + $0x58] sm:$0xff]
        %v307 = vld [vmem:[%s2 + $0x60] sm:$0xf]
        %309 = vset.pattern.permute.xlu0 0
        %310 = vperm.xlu0 %309, %v295
        %v311 = vpop.permute.xlu0 %310
        %314 = vset.pattern.permute.xlu0 0
        %315 = vperm.xlu0 %314, %v296
        %v316 = vpop.permute.xlu0 %315
        %319 = vset.pattern.permute.xlu0 0
        %320 = vperm.xlu0 %319, %v297
        %v321 = vpop.permute.xlu0 %320
        %324 = vset.pattern.permute.xlu0 0
        %325 = vperm.xlu0 %324, %v298
        %v326 = vpop.permute.xlu0 %325
        %329 = vset.pattern.permute.xlu0 0
        %330 = vperm.xlu0 %329, %v299
        %v331 = vpop.permute.xlu0 %330
        %334 = vset.pattern.permute.xlu0 0
        %335 = vperm.xlu0 %334, %v300
        %v336 = vpop.permute.xlu0 %335
        %339 = vset.pattern.permute.xlu0 0
        %340 = vperm.xlu0 %339, %v301
        %v341 = vpop.permute.xlu0 %340
        %344 = vset.pattern.permute.xlu0 0
        %345 = vperm.xlu0 %344, %v302
        %v346 = vpop.permute.xlu0 %345
        %349 = vset.pattern.permute.xlu0 0
        %350 = vperm.xlu0 %349, %v303
        %v351 = vpop.permute.xlu0 %350
        %354 = vset.pattern.permute.xlu0 0
        %355 = vperm.xlu0 %354, %v304
        %v356 = vpop.permute.xlu0 %355
        %359 = vset.pattern.permute.xlu0 0
        %360 = vperm.xlu0 %359, %v305
        %v361 = vpop.permute.xlu0 %360
        %364 = vset.pattern.permute.xlu0 0
        %365 = vperm.xlu0 %364, %v306
        %v366 = vpop.permute.xlu0 %365
        %369 = vset.pattern.permute.xlu0 0
        %370 = vperm.xlu0 %369, %v307
        %v371 = vpop.permute.xlu0 %370
        %v386 = vunpack.c.l.b16 %v282
        %v387 = vunpack.c.l.b16 %v283
        %v388 = vunpack.c.l.b16 %v284
        %v389 = vunpack.c.l.b16 %v285
        %v390 = vunpack.c.l.b16 %v286
        %v391 = vunpack.c.l.b16 %v287
        %v392 = vunpack.c.l.b16 %v288
        %v393 = vunpack.c.l.b16 %v289
        %v394 = vunpack.c.l.b16 %v290
        %v395 = vunpack.c.l.b16 %v291
        %v396 = vunpack.c.l.b16 %v292
        %v397 = vunpack.c.l.b16 %v293
        %v398 = vunpack.c.l.b16 %v294
        %v399 = vpack.c.b16 %v387, %v386
        %v400 = vpack.c.b16 %v389, %v388
        %v401 = vpack.c.b16 %v391, %v390
        %v402 = vpack.c.b16 %v393, %v392
        %v403 = vpack.c.b16 %v395, %v394
        %v404 = vpack.c.b16 %v397, %v396
        %v405 = vpack.c.b16 %v398, %v398
        %v407 = vunpack.c.l.b16 %v281
        %v408 = vunpack.c.h.b16 %v281
        %v409 = vpack.c.b16 %v407, %v407
        %v410 = vpack.c.b16 %v408, %v408
        %vm411 = vcmask 48128
        %v413 = vsel %vm411, %v399, 0
        %v416 = vsel %vm411, %v400, 0
        %v419 = vsel %vm411, %v401, 0
        %v422 = vsel %vm411, %v402, 0
        %v425 = vsel %vm411, %v403, 0
        %v428 = vsel %vm411, %v404, 0
        %v431 = vsel %vm411, %v405, 0
        %vm433 = vcmask 1042432
        %v435 = vsel %vm433, %v409, 0
        %v438 = vsel %vm433, %v410, 0
        %440 = vmatpush.bf16.msra.mxu0 0
        %441 = vmatpush.bf16.msra.mxu0 0
        %442 = vmatpush.bf16.msra.mxu0 0
        %443 = vmatpush.bf16.msra.mxu0 0
        %444 = vmatpush.bf16.msra.mxu0 0
        %445 = vmatpush.bf16.msra.mxu0 0
        %446 = vmatpush.bf16.msra.mxu0 0
        %447 = vmatpush.bf16.msra.mxu0 %v435
        %448 = vmatmul.bf16.gmra.mxu0 %v413
        %v449 = vpop.f32.mrf.mxu0
        %v450 = vadd.f32 %v311, %v449
        %v451 = vpop.f32.mrf.mxu0
        %v452 = vadd.f32 %v316, %v451
        %453 = vmatmul.bf16.gmra.mxu0 %v416
        %v454 = vpop.f32.mrf.mxu0
        %v455 = vadd.f32 %v321, %v454
        %v456 = vpop.f32.mrf.mxu0
        %v457 = vadd.f32 %v326, %v456
        %458 = vmatmul.bf16.gmra.mxu0 %v419
        %v459 = vpop.f32.mrf.mxu0
        %v460 = vadd.f32 %v331, %v459
        %v461 = vpop.f32.mrf.mxu0
        %v462 = vadd.f32 %v336, %v461
        %463 = vmatmul.bf16.gmra.mxu0 %v422
        %v464 = vpop.f32.mrf.mxu0
        %v465 = vadd.f32 %v341, %v464
        %v466 = vpop.f32.mrf.mxu0
        %v467 = vadd.f32 %v346, %v466
        %468 = vmatmul.bf16.gmra.mxu0 %v425
        %v469 = vpop.f32.mrf.mxu0
        %v470 = vadd.f32 %v351, %v469
        %v471 = vpop.f32.mrf.mxu0
        %v472 = vadd.f32 %v356, %v471
        %473 = vmatmul.bf16.gmra.mxu0 %v428
        %v474 = vpop.f32.mrf.mxu0
        %v475 = vadd.f32 %v361, %v474
        %v476 = vpop.f32.mrf.mxu0
        %v477 = vadd.f32 %v366, %v476
        %478 = vmatmul.bf16.gmra.mxu0 %v431
        %v479 = vpop.f32.mrf.mxu0
        %v480 = vadd.f32 %v371, %v479
        %v481 = vpop.f32.mrf.mxu0
        %482 = vdwg.mxu0
        %483 = vmatpush.bf16.msra.mxu0 0
        %484 = vmatpush.bf16.msra.mxu0 0
        %485 = vmatpush.bf16.msra.mxu0 0
        %486 = vmatpush.bf16.msra.mxu0 0
        %487 = vmatpush.bf16.msra.mxu0 0
        %488 = vmatpush.bf16.msra.mxu0 0
        %489 = vmatpush.bf16.msra.mxu0 0
        %490 = vmatpush.bf16.msra.mxu0 %v438
        %491 = vmatmul.bf16.gmra.mxu0 %v413
        %v492 = vpop.f32.mrf.mxu0
        %v493 = vadd.f32 %v311, %v492
        %v494 = vpop.f32.mrf.mxu0
        %v495 = vadd.f32 %v316, %v494
        %496 = vmatmul.bf16.gmra.mxu0 %v416
        %v497 = vpop.f32.mrf.mxu0
        %v498 = vadd.f32 %v321, %v497
        %v499 = vpop.f32.mrf.mxu0
        %v500 = vadd.f32 %v326, %v499
        %501 = vmatmul.bf16.gmra.mxu0 %v419
        %v502 = vpop.f32.mrf.mxu0
        %v503 = vadd.f32 %v331, %v502
        %v504 = vpop.f32.mrf.mxu0
        %v505 = vadd.f32 %v336, %v504
        %506 = vmatmul.bf16.gmra.mxu0 %v422
        %v507 = vpop.f32.mrf.mxu0
        %v508 = vadd.f32 %v341, %v507
        %v509 = vpop.f32.mrf.mxu0
        %v510 = vadd.f32 %v346, %v509
        %511 = vmatmul.bf16.gmra.mxu0 %v425
        %v512 = vpop.f32.mrf.mxu0
        %v513 = vadd.f32 %v351, %v512
        %v514 = vpop.f32.mrf.mxu0
        %v515 = vadd.f32 %v356, %v514
        %516 = vmatmul.bf16.gmra.mxu0 %v428
        %v517 = vpop.f32.mrf.mxu0
        %v518 = vadd.f32 %v361, %v517
        %v519 = vpop.f32.mrf.mxu0
        %v520 = vadd.f32 %v366, %v519
        %521 = vmatmul.bf16.gmra.mxu0 %v431
        %v522 = vpop.f32.mrf.mxu0
        %v523 = vadd.f32 %v371, %v522
        %v524 = vpop.f32.mrf.mxu0
        %525 = vdwg.mxu0
        %vm526 = vcmp.gt.f32.partialorder %v450, 0.0
        %vm527 = vcmp.gt.f32.partialorder %v493, 0.0
        %vm528 = vcmp.gt.f32.partialorder %v452, 0.0
        %vm529 = vcmp.gt.f32.partialorder %v495, 0.0
        %vm530 = vcmp.gt.f32.partialorder %v455, 0.0
        %vm531 = vcmp.gt.f32.partialorder %v498, 0.0
        %vm532 = vcmp.gt.f32.partialorder %v457, 0.0
        %vm533 = vcmp.gt.f32.partialorder %v500, 0.0
        %vm534 = vcmp.gt.f32.partialorder %v460, 0.0
        %vm535 = vcmp.gt.f32.partialorder %v503, 0.0
        %vm536 = vcmp.gt.f32.partialorder %v462, 0.0
        %vm537 = vcmp.gt.f32.partialorder %v505, 0.0
        %vm538 = vcmp.gt.f32.partialorder %v465, 0.0
        %vm539 = vcmp.gt.f32.partialorder %v508, 0.0
        %vm540 = vcmp.gt.f32.partialorder %v467, 0.0
        %vm541 = vcmp.gt.f32.partialorder %v510, 0.0
        %vm542 = vcmp.gt.f32.partialorder %v470, 0.0
        %vm543 = vcmp.gt.f32.partialorder %v513, 0.0
        %vm544 = vcmp.gt.f32.partialorder %v472, 0.0
        %vm545 = vcmp.gt.f32.partialorder %v515, 0.0
        %vm546 = vcmp.gt.f32.partialorder %v475, 0.0
        %vm547 = vcmp.gt.f32.partialorder %v518, 0.0
        %vm548 = vcmp.gt.f32.partialorder %v477, 0.0
        %vm549 = vcmp.gt.f32.partialorder %v520, 0.0
        %vm550 = vcmp.gt.f32.partialorder %v480, 0.0
        %vm551 = vcmp.gt.f32.partialorder %v523, 0.0
        %v552 = vmul.f32 %v450, 0.01
        %v553 = vmul.f32 %v493, 0.01
        %v554 = vmul.f32 %v452, 0.01
        %v555 = vmul.f32 %v495, 0.01
        %v556 = vmul.f32 %v455, 0.01
        %v557 = vmul.f32 %v498, 0.01
        %v558 = vmul.f32 %v457, 0.01
        %v559 = vmul.f32 %v500, 0.01
        %v560 = vmul.f32 %v460, 0.01
        %v561 = vmul.f32 %v503, 0.01
        %v562 = vmul.f32 %v462, 0.01
        %v563 = vmul.f32 %v505, 0.01
        %v564 = vmul.f32 %v465, 0.01
        %v565 = vmul.f32 %v508, 0.01
        %v566 = vmul.f32 %v467, 0.01
        %v567 = vmul.f32 %v510, 0.01
        %v568 = vmul.f32 %v470, 0.01
        %v569 = vmul.f32 %v513, 0.01
        %v570 = vmul.f32 %v472, 0.01
        %v571 = vmul.f32 %v515, 0.01
        %v572 = vmul.f32 %v475, 0.01
        %v573 = vmul.f32 %v518, 0.01
        %v574 = vmul.f32 %v477, 0.01
        %v575 = vmul.f32 %v520, 0.01
        %v576 = vmul.f32 %v480, 0.01
        %v577 = vmul.f32 %v523, 0.01
        %v578 = vsel %vm526, %v450, %v552
        %v579 = vsel %vm527, %v493, %v553
        %v580 = vsel %vm528, %v452, %v554
        %v581 = vsel %vm529, %v495, %v555
        %v582 = vsel %vm530, %v455, %v556
        %v583 = vsel %vm531, %v498, %v557
        %v584 = vsel %vm532, %v457, %v558
        %v585 = vsel %vm533, %v500, %v559
        %v586 = vsel %vm534, %v460, %v560
        %v587 = vsel %vm535, %v503, %v561
        %v588 = vsel %vm536, %v462, %v562
        %v589 = vsel %vm537, %v505, %v563
        %v590 = vsel %vm538, %v465, %v564
        %v591 = vsel %vm539, %v508, %v565
        %v592 = vsel %vm540, %v467, %v566
        %v593 = vsel %vm541, %v510, %v567
        %v594 = vsel %vm542, %v470, %v568
        %v595 = vsel %vm543, %v513, %v569
        %v596 = vsel %vm544, %v472, %v570
        %v597 = vsel %vm545, %v515, %v571
        %v598 = vsel %vm546, %v475, %v572
        %v599 = vsel %vm547, %v518, %v573
        %v600 = vsel %vm548, %v477, %v574
        %v601 = vsel %vm549, %v520, %v575
        %v602 = vsel %vm550, %v480, %v576
        %v603 = vsel %vm551, %v523, %v577
        %v604 = vld [vmem:[%s3] sm:$0xf]
        %v605 = vld [vmem:[%s3 + $0x4] sm:$0xf]
        %v606 = vld [vmem:[%s3 + $0x8] sm:$0xf]
        %v607 = vld [vmem:[%s3 + $0xc] sm:$0xf]
        %v608 = vld [vmem:[%s3 + $0x10] sm:$0xf]
        %v609 = vld [vmem:[%s3 + $0x14] sm:$0xf]
        %v610 = vld [vmem:[%s3 + $0x18] sm:$0x1]
        %v611 = vpack.c.bf16 %v580, %v578
        %v612 = vpack.c.bf16 %v581, %v579
        %v613 = vpack.c.bf16 %v584, %v582
        %v614 = vpack.c.bf16 %v585, %v583
        %v615 = vpack.c.bf16 %v588, %v586
        %v616 = vpack.c.bf16 %v589, %v587
        %v617 = vpack.c.bf16 %v592, %v590
        %v618 = vpack.c.bf16 %v593, %v591
        %v619 = vpack.c.bf16 %v596, %v594
        %v620 = vpack.c.bf16 %v597, %v595
        %v621 = vpack.c.bf16 %v600, %v598
        %v622 = vpack.c.bf16 %v601, %v599
        %v623 = vpack.c.bf16 %v602, %v602
        %v624 = vpack.c.bf16 %v603, %v603
        %v625 = vld [vmem:[%s4] sm:$0xff]
        %v626 = vld [vmem:[%s4 + $0x8] sm:$0xff]
        %v627 = vld [vmem:[%s4 + $0x10] sm:$0xff]
        %v628 = vld [vmem:[%s4 + $0x18] sm:$0xff]
        %v629 = vld [vmem:[%s4 + $0x20] sm:$0xff]
        %v630 = vld [vmem:[%s4 + $0x28] sm:$0xff]
        %v631 = vld [vmem:[%s4 + $0x30] sm:$0x3]
        %633 = vset.pattern.permute.xlu0 0
        %634 = vperm.xlu0 %633, %v625
        %v635 = vpop.permute.xlu0 %634
        %638 = vset.pattern.permute.xlu0 0
        %639 = vperm.xlu0 %638, %v626
        %v640 = vpop.permute.xlu0 %639
        %643 = vset.pattern.permute.xlu0 0
        %644 = vperm.xlu0 %643, %v627
        %v645 = vpop.permute.xlu0 %644
        %648 = vset.pattern.permute.xlu0 0
        %649 = vperm.xlu0 %648, %v628
        %v650 = vpop.permute.xlu0 %649
        %653 = vset.pattern.permute.xlu0 0
        %654 = vperm.xlu0 %653, %v629
        %v655 = vpop.permute.xlu0 %654
        %658 = vset.pattern.permute.xlu0 0
        %659 = vperm.xlu0 %658, %v630
        %v660 = vpop.permute.xlu0 %659
        %663 = vset.pattern.permute.xlu0 0
        %664 = vperm.xlu0 %663, %v631
        %v665 = vpop.permute.xlu0 %664
        %v674 = vunpack.c.l.b16 %v604
        %v675 = vunpack.c.l.b16 %v605
        %v676 = vunpack.c.l.b16 %v606
        %v677 = vunpack.c.l.b16 %v607
        %v678 = vunpack.c.l.b16 %v608
        %v679 = vunpack.c.l.b16 %v609
        %v680 = vunpack.c.l.b16 %v610
        %v681 = vpack.c.b16 %v675, %v674
        %v682 = vpack.c.b16 %v677, %v676
        %v683 = vpack.c.b16 %v679, %v678
        %v684 = vpack.c.b16 %v680, %v680
        %vm685 = vcmask 818176
        %v687 = vsel %vm685, %v681, 0
        %v690 = vsel %vm685, %v682, 0
        %v693 = vsel %vm685, %v683, 0
        %v696 = vsel %vm685, %v684, 0
        %vm698 = vcmask 1041408
        %v700 = vsel %vm698, %v623, 0
        %v703 = vsel %vm698, %v624, 0
        %705 = vmatpush.bf16.msra.mxu0 0
        %706 = vmatpush.bf16.msra.mxu0 %v700
        %707 = vmatpush.bf16.msra.mxu0 %v621
        %708 = vmatpush.bf16.msra.mxu0 %v619
        %709 = vmatpush.bf16.msra.mxu0 %v617
        %710 = vmatpush.bf16.msra.mxu0 %v615
        %711 = vmatpush.bf16.msra.mxu0 %v613
        %712 = vmatpush.bf16.msra.mxu0 %v611
        %713 = vmatmul.bf16.gmra.mxu0 %v687
        %v714 = vpop.f32.mrf.mxu0
        %v715 = vadd.f32 %v635, %v714
        %v716 = vpop.f32.mrf.mxu0
        %v717 = vadd.f32 %v640, %v716
        %718 = vmatmul.bf16.gmra.mxu0 %v690
        %v719 = vpop.f32.mrf.mxu0
        %v720 = vadd.f32 %v645, %v719
        %v721 = vpop.f32.mrf.mxu0
        %v722 = vadd.f32 %v650, %v721
        %723 = vmatmul.bf16.gmra.mxu0 %v693
        %v724 = vpop.f32.mrf.mxu0
        %v725 = vadd.f32 %v655, %v724
        %v726 = vpop.f32.mrf.mxu0
        %v727 = vadd.f32 %v660, %v726
        %728 = vmatmul.bf16.gmra.mxu0 %v696
        %v729 = vpop.f32.mrf.mxu0
        %v730 = vadd.f32 %v665, %v729
        %v731 = vpop.f32.mrf.mxu0
        %732 = vdwg.mxu0
        %733 = vmatpush.bf16.msra.mxu0 0
        %734 = vmatpush.bf16.msra.mxu0 %v703
        %735 = vmatpush.bf16.msra.mxu0 %v622
        %736 = vmatpush.bf16.msra.mxu0 %v620
        %737 = vmatpush.bf16.msra.mxu0 %v618
        %738 = vmatpush.bf16.msra.mxu0 %v616
        %739 = vmatpush.bf16.msra.mxu0 %v614
        %740 = vmatpush.bf16.msra.mxu0 %v612
        %741 = vmatmul.bf16.gmra.mxu0 %v687
        %v742 = vpop.f32.mrf.mxu0
        %v743 = vadd.f32 %v635, %v742
        %v744 = vpop.f32.mrf.mxu0
        %v745 = vadd.f32 %v640, %v744
        %746 = vmatmul.bf16.gmra.mxu0 %v690
        %v747 = vpop.f32.mrf.mxu0
        %v748 = vadd.f32 %v645, %v747
        %v749 = vpop.f32.mrf.mxu0
        %v750 = vadd.f32 %v650, %v749
        %751 = vmatmul.bf16.gmra.mxu0 %v693
        %v752 = vpop.f32.mrf.mxu0
        %v753 = vadd.f32 %v655, %v752
        %v754 = vpop.f32.mrf.mxu0
        %v755 = vadd.f32 %v660, %v754
        %756 = vmatmul.bf16.gmra.mxu0 %v696
        %v757 = vpop.f32.mrf.mxu0
        %v758 = vadd.f32 %v665, %v757
        %v759 = vpop.f32.mrf.mxu0
        %760 = vdwg.mxu0
        %vm761 = vcmp.gt.f32.partialorder %v715, 0.0
        %vm762 = vcmp.gt.f32.partialorder %v743, 0.0
        %vm763 = vcmp.gt.f32.partialorder %v717, 0.0
        %vm764 = vcmp.gt.f32.partialorder %v745, 0.0
        %vm765 = vcmp.gt.f32.partialorder %v720, 0.0
        %vm766 = vcmp.gt.f32.partialorder %v748, 0.0
        %vm767 = vcmp.gt.f32.partialorder %v722, 0.0
        %vm768 = vcmp.gt.f32.partialorder %v750, 0.0
        %vm769 = vcmp.gt.f32.partialorder %v725, 0.0
        %vm770 = vcmp.gt.f32.partialorder %v753, 0.0
        %vm771 = vcmp.gt.f32.partialorder %v727, 0.0
        %vm772 = vcmp.gt.f32.partialorder %v755, 0.0
        %vm773 = vcmp.gt.f32.partialorder %v730, 0.0
        %vm774 = vcmp.gt.f32.partialorder %v758, 0.0
        %v775 = vmul.f32 %v715, 0.01
        %v776 = vmul.f32 %v743, 0.01
        %v777 = vmul.f32 %v717, 0.01
        %v778 = vmul.f32 %v745, 0.01
        %v779 = vmul.f32 %v720, 0.01
        %v780 = vmul.f32 %v748, 0.01
        %v781 = vmul.f32 %v722, 0.01
        %v782 = vmul.f32 %v750, 0.01
        %v783 = vmul.f32 %v725, 0.01
        %v784 = vmul.f32 %v753, 0.01
        %v785 = vmul.f32 %v727, 0.01
        %v786 = vmul.f32 %v755, 0.01
        %v787 = vmul.f32 %v730, 0.01
        %v788 = vmul.f32 %v758, 0.01
        %v789 = vsel %vm761, %v715, %v775
        %v790 = vsel %vm762, %v743, %v776
        %v791 = vsel %vm763, %v717, %v777
        %v792 = vsel %vm764, %v745, %v778
        %v793 = vsel %vm765, %v720, %v779
        %v794 = vsel %vm766, %v748, %v780
        %v795 = vsel %vm767, %v722, %v781
        %v796 = vsel %vm768, %v750, %v782
        %v797 = vsel %vm769, %v725, %v783
        %v798 = vsel %vm770, %v753, %v784
        %v799 = vsel %vm771, %v727, %v785
        %v800 = vsel %vm772, %v755, %v786
        %v801 = vsel %vm773, %v730, %v787
        %v802 = vsel %vm774, %v758, %v788
        %v803 = vld [vmem:[%s5] sm:$0x7]
        %v804 = vpack.c.bf16 %v791, %v789
        %v805 = vpack.c.bf16 %v792, %v790
        %v806 = vpack.c.bf16 %v795, %v793
        %v807 = vpack.c.bf16 %v796, %v794
        %v808 = vpack.c.bf16 %v799, %v797
        %v809 = vpack.c.bf16 %v800, %v798
        %v810 = vpack.c.bf16 %v801, %v801
        %v811 = vpack.c.bf16 %v802, %v802
        %v812 = vld [vmem:[%s6] sm:$0x3f]
        %814 = vset.pattern.permute.xlu0 0
        %815 = vperm.xlu0 %814, %v812
        %v816 = vpop.permute.xlu0 %815
        %vm818 = vcmask 408576
        %v820 = vsel %vm818, %v803, 0
        %vm822 = vcmask 1040384
        %v824 = vsel %vm822, %v810, 0
        %v827 = vsel %vm822, %v811, 0
        %829 = vmatpush.bf16.msra.mxu0 0
        %830 = vmatpush.bf16.msra.mxu0 0
        %831 = vmatpush.bf16.msra.mxu0 0
        %832 = vmatpush.bf16.msra.mxu0 0
        %833 = vmatpush.bf16.msra.mxu0 %v824
        %834 = vmatpush.bf16.msra.mxu0 %v808
        %835 = vmatpush.bf16.msra.mxu0 %v806
        %836 = vmatpush.bf16.msra.mxu0 %v804
        %837 = vmatmul.bf16.gmra.mxu0 %v820
        %v838 = vpop.f32.mrf.mxu0
        %v839 = vadd.f32 %v816, %v838
        %v840 = vpop.f32.mrf.mxu0
        %841 = vdwg.mxu0
        %842 = vmatpush.bf16.msra.mxu0 0
        %843 = vmatpush.bf16.msra.mxu0 0
        %844 = vmatpush.bf16.msra.mxu0 0
        %845 = vmatpush.bf16.msra.mxu0 0
        %846 = vmatpush.bf16.msra.mxu0 %v827
        %847 = vmatpush.bf16.msra.mxu0 %v809
        %848 = vmatpush.bf16.msra.mxu0 %v807
        %849 = vmatpush.bf16.msra.mxu0 %v805
        %850 = vmatmul.bf16.gmra.mxu0 %v820
        %v851 = vpop.f32.mrf.mxu0
        %v852 = vadd.f32 %v816, %v851
        %v853 = vpop.f32.mrf.mxu0
        %854 = vdwg.mxu0
        %855 = vst [vmem:[%s272] sm:$0x3f] %v839
        %856 = vst [vmem:[%s272 + $0x8] sm:$0x3f] %v852
        %s857 = sand.u32 %s181, 1
        %s858 = scalar_lea.sflag [#allocation3], %s857
        %s859 = sand.u32 %s181, 1
        %s860 = smul.addr %s859, 16
        %s861 = scalar_lea.vmem [#allocation2], %s860
        // Predicated region
        $region49: #{tpu_custom_call.1} parent=47 // pred_check
          %p862 = pneg %p191
        $region50: #{tpu_custom_call.1} parent=47 // pred_check_branch
          %864 = sbr.rel (%p862) target = $region52
        $region51: #{tpu_custom_call.1} parent=47 // pred_region
          %s865 = smul.u32 2, %s21
          %867 = vsyncadd %s858, 0
          %s868 = smul.addr %s865, 8
          %s869 = scalar_lea.hbm %s7, %s868
          %s871 = sshll.u32 %s861, 4
          %s872 = int_to_ptr.vmem [resolvable:$true] %s871
          %s873 = sshll.u32 %s869, 4
          %s874 = int_to_ptr.hbm [resolvable:$true] %s873
          %876 = dma.vmem_to_hbm [thread:$0]  %s872, 256, %s874, %s858
        $region52: #{tpu_custom_call.1} parent=47 // pred_fallthru
          _
      $region48: #{tpu_custom_call.1} parent=5 // pred_fallthru
        _
      %p877 = scmp.le.s32.totalorder 2, %s16
      // Predicated region
      $region53: #{tpu_custom_call.1} parent=5 // pred_check
        %p878 = pneg %p877
      $region54: #{tpu_custom_call.1} parent=5 // pred_check_branch
        %880 = sbr.rel (%p878) target = $region56
      $region55: #{tpu_custom_call.1} parent=5 // pred_region
        %s881 = ssub.s32 %s16, 2
        // Predicated region
        $region57: #{tpu_custom_call.1} parent=55 // pred_check
          %p882 = pneg %p197
        $region58: #{tpu_custom_call.1} parent=55 // pred_check_branch
          %884 = sbr.rel (%p882) target = $region60
        $region59: #{tpu_custom_call.1} parent=55 // pred_region
          %s885 = sand.u32 %s182, 1
          %s886 = scalar_lea.sflag [#allocation3], %s885
          %s887 = sand.u32 %s182, 1
          %s888 = smul.addr %s887, 16
          %s889 = scalar_lea.vmem [#allocation2], %s888
          %891 = dma.done %s886, 256
        $region60: #{tpu_custom_call.1} parent=55 // pred_fallthru
          _
      $region56: #{tpu_custom_call.1} parent=5 // pred_fallthru
        _
    $region6: #{tpu_custom_call.1} parent=1 // loop_footer
      %s20 = sadd.s32 1, %s16
    $region7: #{tpu_custom_call.1} parent=1 // loop_footer_branch
      %15 = sbr.rel target = $region3
    $region8: #{tpu_custom_call.1} parent=1 // loop_exit
      _
    %892 = vsyncpa [#allocation3], 1
    %s893 = scalar_lea.sflag [#allocation3], 1
    %894 = vsyncpa %s893, 1

</llo_original>
